<compile_context>
chip_gen: v5e
topology: v5e:2x2
jax: 0.10.0
libtpu: 0.0.40
codegen_flags: <defaults>
</compile_context>

<pallas_src>
import functools

import jax
import jax.numpy as jnp
from jax.experimental import pallas as pl
from jax.experimental.pallas import tpu as pltpu

LANE = 128
SUBLANE = 8
_MIB = 1 << 20
_VMEM_BUDGET = 40 * _MIB   # per-step working-set target (headroom on v7x 64 MiB)
_VMEM_CAP = 64 * _MIB      # never request more than v7x physical VMEM


def _round_up(n: int, m: int) -> int:
    return ((n + m - 1) // m) * m


def _leaky_relu(x, negative_slope=0.01):
    return jnp.where(x >= 0, x, negative_slope * x)


def _mlp_kernel(x_ref, w1_ref, b1_ref, w2_ref, b2_ref, w3_ref, b3_ref, o_ref,
                *, output_tanh: bool):
    # f32 matmuls at HIGHEST precision: the MXU is far from saturated at these
    # sizes, so the extra bf16 passes are hidden under launch/DMA overhead and
    # we keep f32-equivalent accuracy (no loosened tolerance needed).
    prec = jax.lax.Precision.HIGHEST

    h = jnp.dot(x_ref[...], w1_ref[...], precision=prec,
                preferred_element_type=jnp.float32) + b1_ref[...]
    h = _leaky_relu(h)                                     # VPU, f32

    h = jnp.dot(h, w2_ref[...], precision=prec,
                preferred_element_type=jnp.float32) + b2_ref[...]
    h = _leaky_relu(h)

    out = jnp.dot(h, w3_ref[...], precision=prec,
                  preferred_element_type=jnp.float32) + b3_ref[...]

    if output_tanh:
        out = jnp.tanh(out)                                # EUP

    o_ref[...] = out.astype(o_ref.dtype)


def _step_vmem_bytes(tb, input_dim, l1, l2, out_dim):
    """Rough per-grid-step VMEM footprint (bytes), all f32."""
    f32 = 4
    stream = tb * (input_dim + out_dim) * f32                       # x + out tiles
    weights = (input_dim * l1 + l1 + l1 * l2 + l2 + l2 * out_dim + out_dim) * f32
    interm = tb * (l1 + l2) * f32                                   # hidden activations
    # BlockSpec double-buffers inputs/outputs; resident weights are buffered too.
    return 2 * (stream + weights) + interm


def mlp_forward(x, params, *, output_tanh: bool, tile_b: int = 2048):
    """x: (B, input_dim) f32.  params: dict with w1,b1,w2,b2,w3,b3 (f32)."""
    B, input_dim = x.shape
    w1, b1 = params["w1"], params["b1"]
    w2, b2 = params["w2"], params["b2"]
    w3, b3 = params["w3"], params["b3"]
    l1, l2, out_dim = w1.shape[1], w2.shape[1], w3.shape[1]

    # ---- batch-tile selection ----
    B_pad = _round_up(B, SUBLANE)
    tb = min(tile_b, B_pad)
    # Only force >=2 grid steps (v7x megacore sharding) when each shard is
    # still a full MXU-height tile (>=256 rows).  On v5e/v6e (single TC) and
    # for small batches a single big tile wins (no extra ~0.35us/step).
    if tb == B_pad and B_pad // 2 >= 256:
        tb = B_pad // 2
    tb = max(SUBLANE, (tb // SUBLANE) * SUBLANE)
    # Shrink the tile until the per-step footprint fits the VMEM budget.
    while tb > SUBLANE and _step_vmem_bytes(tb, input_dim, l1, l2, out_dim) > _VMEM_BUDGET:
        tb = max(SUBLANE, ((tb // 2) // SUBLANE) * SUBLANE)
    B_pad = _round_up(B_pad, tb)            # grid divides evenly, no remainder

    xp = x if B_pad == B else jnp.pad(x, ((0, B_pad - B), (0, 0)))
    grid = (B_pad // tb,)

    footprint = _step_vmem_bytes(tb, input_dim, l1, l2, out_dim)
    vmem_limit = int(min(_VMEM_CAP,
                         max(16 * _MIB, _round_up(int(1.5 * footprint), _MIB))))

    kernel = functools.partial(_mlp_kernel, output_tanh=output_tanh)

    # Weights / biases: full-array blocks, resident across all grid steps.
    # TODO(synk): for very wide hidden layers (e.g. >=2048) add a grid axis
    # tiling the N dim of w2/w3 instead of keeping them whole in VMEM.
    full = lambda shape: pl.BlockSpec(shape, lambda i: (0,) * len(shape))

    out_padded = pl.pallas_call(
        kernel,
        out_shape=jax.ShapeDtypeStruct((B_pad, out_dim), x.dtype),
        grid=grid,
        in_specs=[
            pl.BlockSpec((tb, input_dim), lambda i: (i, 0)),  # x tile (streams)
            full((input_dim, l1)),                            # w1
            full((1, l1)),                                    # b1
            full((l1, l2)),                                   # w2
            full((1, l2)),                                    # b2
            full((l2, out_dim)),                              # w3
            full((1, out_dim)),                               # b3
        ],
        out_specs=pl.BlockSpec((tb, out_dim), lambda i: (i, 0)),
        compiler_params=pltpu.CompilerParams(
            dimension_semantics=("parallel",),
            vmem_limit_bytes=vmem_limit),
    )(xp, w1, b1, w2, b2, w3, b3)

    return out_padded if B_pad == B else out_padded[:B]


def init_params(key, input_dim, layer1_dim, layer2_dim, output_dim):
    """Deterministic init mirroring nn.Linear shapes (stored transposed)."""
    ks = jax.random.split(key, 6)

    def linear(kw, kb, fan_in, fan_out):
        bound = 1.0 / jnp.sqrt(fan_in)
        w = jax.random.uniform(kw, (fan_in, fan_out), jnp.float32, -bound, bound)
        b = jax.random.uniform(kb, (1, fan_out), jnp.float32, -bound, bound)
        return w, b

    w1, b1 = linear(ks[0], ks[1], input_dim, layer1_dim)
    w2, b2 = linear(ks[2], ks[3], layer1_dim, layer2_dim)
    w3, b3 = linear(ks[4], ks[5], layer2_dim, output_dim)
    return {"w1": w1, "b1": b1, "w2": w2, "b2": b2, "w3": w3, "b3": b3}


def _reference(x, p, output_tanh):
    h = _leaky_relu(x @ p["w1"] + p["b1"])
    h = _leaky_relu(h @ p["w2"] + p["b2"])
    out = h @ p["w3"] + p["b3"]
    return jnp.tanh(out) if output_tanh else out


if __name__ == "__main__":
    key = jax.random.PRNGKey(0)
    k_x, k_p = jax.random.split(key)

    batch, input_dim, layer1_dim, layer2_dim, output_dim = 64, 16, 32, 32, 8
    output_tanh = True

    x = jax.random.normal(k_x, (batch, input_dim), jnp.float32)
    params = init_params(k_p, input_dim, layer1_dim, layer2_dim, output_dim)

    out = mlp_forward(x, params, output_tanh=output_tanh)
    out = jax.block_until_ready(out)

    ref = _reference(x, params, output_tanh)
    assert out.shape == (batch, output_dim)
    # f32 inputs + HIGHEST-precision MXU passes -> near-f32 parity, tight tol.
    assert jnp.allclose(out, ref, atol=1e-4, rtol=1e-4), "mismatch vs reference"

    print("KERNEL_OK")
</pallas_src>

<mosaic_0001>
module attributes {stable_mosaic.version = 11 : i64} {
  func.func @_mlp_kernel(%arg0: i32, %arg1: memref<64x16xf32, #tpu.memory_space<vmem>>, %arg2: memref<16x32xf32, #tpu.memory_space<vmem>>, %arg3: memref<1x32xf32, #tpu.memory_space<vmem>>, %arg4: memref<32x32xf32, #tpu.memory_space<vmem>>, %arg5: memref<1x32xf32, #tpu.memory_space<vmem>>, %arg6: memref<32x8xf32, #tpu.memory_space<vmem>>, %arg7: memref<1x8xf32, #tpu.memory_space<vmem>>, %arg8: memref<64x8xf32, #tpu.memory_space<vmem>>) attributes {dimension_semantics = [#tpu.dimension_semantics<parallel>], iteration_bounds = array<i64: 1>, scalar_prefetch = 0 : i64, scratch_operands = 0 : i64, tpu.core_type = #tpu.core_type<tc>, window_params = [{transform_indices = @transform_0, window_bounds = array<i64: 64, 16>}, {pipeline_mode = #tpu.pipeline_mode<synchronous>, transform_indices = @transform_1, window_bounds = array<i64: 16, 32>}, {pipeline_mode = #tpu.pipeline_mode<synchronous>, transform_indices = @transform_2, window_bounds = array<i64: 1, 32>}, {pipeline_mode = #tpu.pipeline_mode<synchronous>, transform_indices = @transform_3, window_bounds = array<i64: 32, 32>}, {pipeline_mode = #tpu.pipeline_mode<synchronous>, transform_indices = @transform_4, window_bounds = array<i64: 1, 32>}, {pipeline_mode = #tpu.pipeline_mode<synchronous>, transform_indices = @transform_5, window_bounds = array<i64: 32, 8>}, {pipeline_mode = #tpu.pipeline_mode<synchronous>, transform_indices = @transform_6, window_bounds = array<i64: 1, 8>}, {transform_indices = @transform_7, window_bounds = array<i64: 64, 8>}]} {
    %c0 = arith.constant 0 : index
    %c0_0 = arith.constant 0 : index
    %0 = vector.load %arg1[%c0, %c0_0] : memref<64x16xf32, #tpu.memory_space<vmem>>, vector<64x16xf32>
    %c0_1 = arith.constant 0 : index
    %c0_2 = arith.constant 0 : index
    %1 = vector.load %arg2[%c0_1, %c0_2] : memref<16x32xf32, #tpu.memory_space<vmem>>, vector<16x32xf32>
    %cst = arith.constant dense<0.000000e+00> : vector<64x32xf32>
    %2 = tpu.matmul %0, %1, %cst {dimension_numbers = #tpu.dot_dimension_numbers<[1], [0], [0], [1], [0, 0, 1, 1], [], []>, precision = #tpu.contract_precision<fp32>} : vector<64x16xf32>, vector<16x32xf32>, vector<64x32xf32> -> vector<64x32xf32>
    %c0_3 = arith.constant 0 : index
    %c0_4 = arith.constant 0 : index
    %3 = vector.load %arg3[%c0_3, %c0_4] : memref<1x32xf32, #tpu.memory_space<vmem>>, vector<1x32xf32>
    %4 = vector.broadcast %3 : vector<1x32xf32> to vector<64x32xf32>
    %5 = arith.addf %2, %4 : vector<64x32xf32>
    %cst_5 = arith.constant 0.000000e+00 : f32
    %6 = vector.broadcast %cst_5 : f32 to vector<64x32xf32>
    %7 = arith.cmpf oge, %5, %6 : vector<64x32xf32>
    %cst_6 = arith.constant 0.00999999977 : f32
    %8 = vector.broadcast %cst_6 : f32 to vector<64x32xf32>
    %9 = arith.mulf %8, %5 : vector<64x32xf32>
    %10 = arith.select %7, %5, %9 : vector<64x32xi1>, vector<64x32xf32>
    %c0_7 = arith.constant 0 : index
    %c0_8 = arith.constant 0 : index
    %11 = vector.load %arg4[%c0_7, %c0_8] : memref<32x32xf32, #tpu.memory_space<vmem>>, vector<32x32xf32>
    %cst_9 = arith.constant dense<0.000000e+00> : vector<64x32xf32>
    %12 = tpu.matmul %10, %11, %cst_9 {dimension_numbers = #tpu.dot_dimension_numbers<[1], [0], [0], [1], [0, 0, 1, 1], [], []>, precision = #tpu.contract_precision<fp32>} : vector<64x32xf32>, vector<32x32xf32>, vector<64x32xf32> -> vector<64x32xf32>
    %c0_10 = arith.constant 0 : index
    %c0_11 = arith.constant 0 : index
    %13 = vector.load %arg5[%c0_10, %c0_11] : memref<1x32xf32, #tpu.memory_space<vmem>>, vector<1x32xf32>
    %14 = vector.broadcast %13 : vector<1x32xf32> to vector<64x32xf32>
    %15 = arith.addf %12, %14 : vector<64x32xf32>
    %cst_12 = arith.constant 0.000000e+00 : f32
    %16 = vector.broadcast %cst_12 : f32 to vector<64x32xf32>
    %17 = arith.cmpf oge, %15, %16 : vector<64x32xf32>
    %cst_13 = arith.constant 0.00999999977 : f32
    %18 = vector.broadcast %cst_13 : f32 to vector<64x32xf32>
    %19 = arith.mulf %18, %15 : vector<64x32xf32>
    %20 = arith.select %17, %15, %19 : vector<64x32xi1>, vector<64x32xf32>
    %c0_14 = arith.constant 0 : index
    %c0_15 = arith.constant 0 : index
    %21 = vector.load %arg6[%c0_14, %c0_15] : memref<32x8xf32, #tpu.memory_space<vmem>>, vector<32x8xf32>
    %cst_16 = arith.constant dense<0.000000e+00> : vector<64x8xf32>
    %22 = tpu.matmul %20, %21, %cst_16 {dimension_numbers = #tpu.dot_dimension_numbers<[1], [0], [0], [1], [0, 0, 1, 1], [], []>, precision = #tpu.contract_precision<fp32>} : vector<64x32xf32>, vector<32x8xf32>, vector<64x8xf32> -> vector<64x8xf32>
    %c0_17 = arith.constant 0 : index
    %c0_18 = arith.constant 0 : index
    %23 = vector.load %arg7[%c0_17, %c0_18] : memref<1x8xf32, #tpu.memory_space<vmem>>, vector<1x8xf32>
    %24 = vector.broadcast %23 : vector<1x8xf32> to vector<64x8xf32>
    %25 = arith.addf %22, %24 : vector<64x8xf32>
    %26 = math.tanh %25 : vector<64x8xf32>
    %c0_19 = arith.constant 0 : index
    %c0_20 = arith.constant 0 : index
    %27 = vector.load %arg8[%c0_19, %c0_20] : memref<64x8xf32, #tpu.memory_space<vmem>>, vector<64x8xf32>
    tpu.vector_store %arg8[%c0_19, %c0_20], %26 {strides = array<i32>} : memref<64x8xf32, #tpu.memory_space<vmem>>, vector<64x8xf32>,
    return
  }
  func.func @transform_0(%arg0: i32) -> (i32, i32) {
    %c0_i32 = arith.constant 0 : i32
    %c0_i32_0 = arith.constant 0 : i32
    return %arg0, %c0_i32 : i32, i32
  }
  func.func @transform_1(%arg0: i32) -> (i32, i32) {
    %c0_i32 = arith.constant 0 : i32
    %c0_i32_0 = arith.constant 0 : i32
    %c0_i32_1 = arith.constant 0 : i32
    return %c0_i32, %c0_i32_0 : i32, i32
  }
  func.func @transform_2(%arg0: i32) -> (i32, i32) {
    %c0_i32 = arith.constant 0 : i32
    %c0_i32_0 = arith.constant 0 : i32
    %c0_i32_1 = arith.constant 0 : i32
    return %c0_i32, %c0_i32_0 : i32, i32
  }
  func.func @transform_3(%arg0: i32) -> (i32, i32) {
    %c0_i32 = arith.constant 0 : i32
    %c0_i32_0 = arith.constant 0 : i32
    %c0_i32_1 = arith.constant 0 : i32
    return %c0_i32, %c0_i32_0 : i32, i32
  }
  func.func @transform_4(%arg0: i32) -> (i32, i32) {
    %c0_i32 = arith.constant 0 : i32
    %c0_i32_0 = arith.constant 0 : i32
    %c0_i32_1 = arith.constant 0 : i32
    return %c0_i32, %c0_i32_0 : i32, i32
  }
  func.func @transform_5(%arg0: i32) -> (i32, i32) {
    %c0_i32 = arith.constant 0 : i32
    %c0_i32_0 = arith.constant 0 : i32
    %c0_i32_1 = arith.constant 0 : i32
    return %c0_i32, %c0_i32_0 : i32, i32
  }
  func.func @transform_6(%arg0: i32) -> (i32, i32) {
    %c0_i32 = arith.constant 0 : i32
    %c0_i32_0 = arith.constant 0 : i32
    %c0_i32_1 = arith.constant 0 : i32
    return %c0_i32, %c0_i32_0 : i32, i32
  }
  func.func @transform_7(%arg0: i32) -> (i32, i32) {
    %c0_i32 = arith.constant 0 : i32
    %c0_i32_0 = arith.constant 0 : i32
    return %arg0, %c0_i32 : i32, i32
  }
}

</mosaic_0001>

<llo_original>
// kernel: tpu_custom_call.1
$region0: #{tpu_custom_call.1}
  #allocation0 [shape = 'u32[]', space=smem, size = 0x4, offset = 0x4, fixed_abs, tag = 'smem constant byte address 0x4 - core index']
  #allocation1 [shape = 'u32[72,128]{1,0:T(1,128)}', space=vmem, size = 0x9000, scoped, tag = 'internal scratch']
  %s0 = inlined_call_operand.vmem [shape: f32[64,16], index: 0, kind: input, shape index: {}]
  %s1 = inlined_call_operand.vmem [shape: f32[16,32], index: 1, kind: input, shape index: {}]
  %s2 = inlined_call_operand.vmem [shape: f32[1,32], index: 2, kind: input, shape index: {}]
  %s3 = inlined_call_operand.vmem [shape: f32[32,32], index: 3, kind: input, shape index: {}]
  %s4 = inlined_call_operand.vmem [shape: f32[1,32], index: 4, kind: input, shape index: {}]
  %s5 = inlined_call_operand.vmem [shape: f32[32,8], index: 5, kind: input, shape index: {}]
  %s6 = inlined_call_operand.vmem [shape: f32[1,8], index: 6, kind: input, shape index: {}]
  %s7 = inlined_call_operand.vmem [shape: f32[64,8], index: 7, kind: output, shape index: {}]
  %s8 = sld [smem:[#allocation0]]
  $region38: #{tpu_custom_call.1} parent=0
    _
  %s10 = ssub.s32 1, %s8
  %s11 = scalar_select 0, %s10, %s8
  // Predicated region
  $region2: #{tpu_custom_call.1} parent=0 // pred_check
    _
  $region3: #{tpu_custom_call.1} parent=0 // pred_check_branch
    %13 = sbr.rel (0) target = $region5
  $region4: #{tpu_custom_call.1} parent=0 // pred_region
    _
  $region5: #{tpu_custom_call.1} parent=0 // pred_fallthru
    _
  // Predicated region
  $region6: #{tpu_custom_call.1} parent=0 // pred_check
    _
  $region7: #{tpu_custom_call.1} parent=0 // pred_check_branch
    %15 = sbr.rel (0) target = $region9
  $region8: #{tpu_custom_call.1} parent=0 // pred_region
    _
  $region9: #{tpu_custom_call.1} parent=0 // pred_fallthru
    _
  // Predicated region
  $region10: #{tpu_custom_call.1} parent=0 // pred_check
    _
  $region11: #{tpu_custom_call.1} parent=0 // pred_check_branch
    %17 = sbr.rel (0) target = $region13
  $region12: #{tpu_custom_call.1} parent=0 // pred_region
    _
  $region13: #{tpu_custom_call.1} parent=0 // pred_fallthru
    _
  // Predicated region
  $region14: #{tpu_custom_call.1} parent=0 // pred_check
    _
  $region15: #{tpu_custom_call.1} parent=0 // pred_check_branch
    %19 = sbr.rel (0) target = $region17
  $region16: #{tpu_custom_call.1} parent=0 // pred_region
    _
  $region17: #{tpu_custom_call.1} parent=0 // pred_fallthru
    _
  // Predicated region
  $region18: #{tpu_custom_call.1} parent=0 // pred_check
    _
  $region19: #{tpu_custom_call.1} parent=0 // pred_check_branch
    %21 = sbr.rel (0) target = $region21
  $region20: #{tpu_custom_call.1} parent=0 // pred_region
    _
  $region21: #{tpu_custom_call.1} parent=0 // pred_fallthru
    _
  // Predicated region
  $region22: #{tpu_custom_call.1} parent=0 // pred_check
    _
  $region23: #{tpu_custom_call.1} parent=0 // pred_check_branch
    %23 = sbr.rel (0) target = $region25
  $region24: #{tpu_custom_call.1} parent=0 // pred_region
    _
  $region25: #{tpu_custom_call.1} parent=0 // pred_fallthru
    _
  // Predicated region
  $region26: #{tpu_custom_call.1} parent=0 // pred_check
    _
  $region27: #{tpu_custom_call.1} parent=0 // pred_check_branch
    %25 = sbr.rel (0) target = $region29
  $region28: #{tpu_custom_call.1} parent=0 // pred_region
    _
  $region29: #{tpu_custom_call.1} parent=0 // pred_fallthru
    _
  %v26 = vld [vmem:[%s0] sm:$0xff]
  %v27 = vld [vmem:[%s0 + $0x8] sm:$0xff]
  %v28 = vld [vmem:[%s0 + $0x10] sm:$0xff]
  %v29 = vld [vmem:[%s0 + $0x18] sm:$0xff]
  %v30 = vld [vmem:[%s0 + $0x20] sm:$0xff]
  %v31 = vld [vmem:[%s0 + $0x28] sm:$0xff]
  %v32 = vld [vmem:[%s0 + $0x30] sm:$0xff]
  %v33 = vld [vmem:[%s0 + $0x38] sm:$0xff]
  %v34 = vld [vmem:[%s1] sm:$0xff]
  %v35 = vld [vmem:[%s1 + $0x8] sm:$0xff]
  %v36 = vld [vmem:[%s2] sm:$0x1]
  %v38 = vperm.slane %v36, 0
  %vm40 = vcmask 130048
  %v42 = vsel %vm40, %v26, 0
  %v45 = vsel %vm40, %v27, 0
  %v48 = vsel %vm40, %v28, 0
  %v51 = vsel %vm40, %v29, 0
  %v54 = vsel %vm40, %v30, 0
  %v57 = vsel %vm40, %v31, 0
  %v60 = vsel %vm40, %v32, 0
  %v63 = vsel %vm40, %v33, 0
  %65 = vmatpush.msra.mxu0 0.0
  %66 = vmatpush.msra.mxu0 0.0
  %67 = vmatpush.msra.mxu0 0.0
  %68 = vmatpush.msra.mxu0 0.0
  %69 = vmatpush.msra.mxu0 0.0
  %70 = vmatpush.msra.mxu0 0.0
  %71 = vmatpush.msra.mxu0 0.0
  %72 = vmatpush.msra.mxu0 0.0
  %73 = vmatpush.msra.mxu0 0.0
  %74 = vmatpush.msra.mxu0 0.0
  %75 = vmatpush.msra.mxu0 0.0
  %76 = vmatpush.msra.mxu0 0.0
  %77 = vmatpush.msra.mxu0 0.0
  %78 = vmatpush.msra.mxu0 0.0
  %v79 = vand.u32 %v35, 4294901760
  %80 = vmatpush.msra.mxu0 %v79
  %v81 = vand.u32 %v34, 4294901760
  %82 = vmatpush.msra.mxu0 %v81
  %v83 = vand.u32 %v42, 4294901760
  %v84 = vsub.f32 %v42, %v83
  %v85 = vand.u32 %v84, 4294901760
  %v86 = vsub.f32 %v84, %v85
  %v87 = vand.u32 %v86, 4294901760
  %88 = vmatmul.f32.gmra.mxu0 %v87
  %v89 = vpop.f32.mrf.mxu0
  %v90 = vadd.f32 %v38, %v89
  %v91 = vand.u32 %v45, 4294901760
  %v92 = vsub.f32 %v45, %v91
  %v93 = vand.u32 %v92, 4294901760
  %v94 = vsub.f32 %v92, %v93
  %v95 = vand.u32 %v94, 4294901760
  %96 = vmatmul.f32.gmra.mxu0 %v95
  %v97 = vpop.f32.mrf.mxu0
  %v98 = vadd.f32 %v38, %v97
  %v99 = vand.u32 %v48, 4294901760
  %v100 = vsub.f32 %v48, %v99
  %v101 = vand.u32 %v100, 4294901760
  %v102 = vsub.f32 %v100, %v101
  %v103 = vand.u32 %v102, 4294901760
  %104 = vmatmul.f32.gmra.mxu0 %v103
  %v105 = vpop.f32.mrf.mxu0
  %v106 = vadd.f32 %v38, %v105
  %v107 = vand.u32 %v51, 4294901760
  %v108 = vsub.f32 %v51, %v107
  %v109 = vand.u32 %v108, 4294901760
  %v110 = vsub.f32 %v108, %v109
  %v111 = vand.u32 %v110, 4294901760
  %112 = vmatmul.f32.gmra.mxu0 %v111
  %v113 = vpop.f32.mrf.mxu0
  %v114 = vadd.f32 %v38, %v113
  %v115 = vand.u32 %v54, 4294901760
  %v116 = vsub.f32 %v54, %v115
  %v117 = vand.u32 %v116, 4294901760
  %v118 = vsub.f32 %v116, %v117
  %v119 = vand.u32 %v118, 4294901760
  %120 = vmatmul.f32.gmra.mxu0 %v119
  %v121 = vpop.f32.mrf.mxu0
  %v122 = vadd.f32 %v38, %v121
  %v123 = vand.u32 %v57, 4294901760
  %v124 = vsub.f32 %v57, %v123
  %v125 = vand.u32 %v124, 4294901760
  %v126 = vsub.f32 %v124, %v125
  %v127 = vand.u32 %v126, 4294901760
  %128 = vmatmul.f32.gmra.mxu0 %v127
  %v129 = vpop.f32.mrf.mxu0
  %v130 = vadd.f32 %v38, %v129
  %v131 = vand.u32 %v60, 4294901760
  %v132 = vsub.f32 %v60, %v131
  %v133 = vand.u32 %v132, 4294901760
  %v134 = vsub.f32 %v132, %v133
  %v135 = vand.u32 %v134, 4294901760
  %136 = vmatmul.f32.gmra.mxu0 %v135
  %v137 = vpop.f32.mrf.mxu0
  %v138 = vadd.f32 %v38, %v137
  %v139 = vand.u32 %v63, 4294901760
  %v140 = vsub.f32 %v63, %v139
  %v141 = vand.u32 %v140, 4294901760
  %v142 = vsub.f32 %v140, %v141
  %v143 = vand.u32 %v142, 4294901760
  %144 = vmatmul.f32.gmra.mxu0 %v143
  %v145 = vpop.f32.mrf.mxu0
  %v146 = vadd.f32 %v38, %v145
  %147 = vdwg.mxu0
  %148 = vmatpush.msra.mxu0 0.0
  %149 = vmatpush.msra.mxu0 0.0
  %150 = vmatpush.msra.mxu0 0.0
  %151 = vmatpush.msra.mxu0 0.0
  %152 = vmatpush.msra.mxu0 0.0
  %153 = vmatpush.msra.mxu0 0.0
  %154 = vmatpush.msra.mxu0 0.0
  %155 = vmatpush.msra.mxu0 0.0
  %156 = vmatpush.msra.mxu0 0.0
  %157 = vmatpush.msra.mxu0 0.0
  %158 = vmatpush.msra.mxu0 0.0
  %159 = vmatpush.msra.mxu0 0.0
  %160 = vmatpush.msra.mxu0 0.0
  %161 = vmatpush.msra.mxu0 0.0
  %v162 = vand.u32 %v35, 4294901760
  %v163 = vsub.f32 %v35, %v162
  %v164 = vand.u32 %v163, 4294901760
  %v165 = vsub.f32 %v163, %v164
  %v166 = vand.u32 %v165, 4294901760
  %167 = vmatpush.msra.mxu0 %v166
  %v168 = vand.u32 %v34, 4294901760
  %v169 = vsub.f32 %v34, %v168
  %v170 = vand.u32 %v169, 4294901760
  %v171 = vsub.f32 %v169, %v170
  %v172 = vand.u32 %v171, 4294901760
  %173 = vmatpush.msra.mxu0 %v172
  %v174 = vand.u32 %v42, 4294901760
  %175 = vmatmul.f32.gmra.mxu0 %v174
  %v176 = vpop.f32.mrf.mxu0
  %v177 = vadd.f32 %v90, %v176
  %v178 = vand.u32 %v45, 4294901760
  %179 = vmatmul.f32.gmra.mxu0 %v178
  %v180 = vpop.f32.mrf.mxu0
  %v181 = vadd.f32 %v98, %v180
  %v182 = vand.u32 %v48, 4294901760
  %183 = vmatmul.f32.gmra.mxu0 %v182
  %v184 = vpop.f32.mrf.mxu0
  %v185 = vadd.f32 %v106, %v184
  %v186 = vand.u32 %v51, 4294901760
  %187 = vmatmul.f32.gmra.mxu0 %v186
  %v188 = vpop.f32.mrf.mxu0
  %v189 = vadd.f32 %v114, %v188
  %v190 = vand.u32 %v54, 4294901760
  %191 = vmatmul.f32.gmra.mxu0 %v190
  %v192 = vpop.f32.mrf.mxu0
  %v193 = vadd.f32 %v122, %v192
  %v194 = vand.u32 %v57, 4294901760
  %195 = vmatmul.f32.gmra.mxu0 %v194
  %v196 = vpop.f32.mrf.mxu0
  %v197 = vadd.f32 %v130, %v196
  %v198 = vand.u32 %v60, 4294901760
  %199 = vmatmul.f32.gmra.mxu0 %v198
  %v200 = vpop.f32.mrf.mxu0
  %v201 = vadd.f32 %v138, %v200
  %v202 = vand.u32 %v63, 4294901760
  %203 = vmatmul.f32.gmra.mxu0 %v202
  %v204 = vpop.f32.mrf.mxu0
  %v205 = vadd.f32 %v146, %v204
  %206 = vdwg.mxu0
  %207 = vmatpush.msra.mxu0 0.0
  %208 = vmatpush.msra.mxu0 0.0
  %209 = vmatpush.msra.mxu0 0.0
  %210 = vmatpush.msra.mxu0 0.0
  %211 = vmatpush.msra.mxu0 0.0
  %212 = vmatpush.msra.mxu0 0.0
  %213 = vmatpush.msra.mxu0 0.0
  %214 = vmatpush.msra.mxu0 0.0
  %215 = vmatpush.msra.mxu0 0.0
  %216 = vmatpush.msra.mxu0 0.0
  %217 = vmatpush.msra.mxu0 0.0
  %218 = vmatpush.msra.mxu0 0.0
  %219 = vmatpush.msra.mxu0 0.0
  %220 = vmatpush.msra.mxu0 0.0
  %v221 = vand.u32 %v35, 4294901760
  %v222 = vsub.f32 %v35, %v221
  %223 = vmatpush.msra.mxu0 %v222
  %v224 = vand.u32 %v34, 4294901760
  %v225 = vsub.f32 %v34, %v224
  %226 = vmatpush.msra.mxu0 %v225
  %v227 = vand.u32 %v42, 4294901760
  %v228 = vsub.f32 %v42, %v227
  %229 = vmatmul.f32.gmra.mxu0 %v228
  %v230 = vpop.f32.mrf.mxu0
  %v231 = vadd.f32 %v177, %v230
  %v232 = vand.u32 %v45, 4294901760
  %v233 = vsub.f32 %v45, %v232
  %234 = vmatmul.f32.gmra.mxu0 %v233
  %v235 = vpop.f32.mrf.mxu0
  %v236 = vadd.f32 %v181, %v235
  %v237 = vand.u32 %v48, 4294901760
  %v238 = vsub.f32 %v48, %v237
  %239 = vmatmul.f32.gmra.mxu0 %v238
  %v240 = vpop.f32.mrf.mxu0
  %v241 = vadd.f32 %v185, %v240
  %v242 = vand.u32 %v51, 4294901760
  %v243 = vsub.f32 %v51, %v242
  %244 = vmatmul.f32.gmra.mxu0 %v243
  %v245 = vpop.f32.mrf.mxu0
  %v246 = vadd.f32 %v189, %v245
  %v247 = vand.u32 %v54, 4294901760
  %v248 = vsub.f32 %v54, %v247
  %249 = vmatmul.f32.gmra.mxu0 %v248
  %v250 = vpop.f32.mrf.mxu0
  %v251 = vadd.f32 %v193, %v250
  %v252 = vand.u32 %v57, 4294901760
  %v253 = vsub.f32 %v57, %v252
  %254 = vmatmul.f32.gmra.mxu0 %v253
  %v255 = vpop.f32.mrf.mxu0
  %v256 = vadd.f32 %v197, %v255
  %v257 = vand.u32 %v60, 4294901760
  %v258 = vsub.f32 %v60, %v257
  %259 = vmatmul.f32.gmra.mxu0 %v258
  %v260 = vpop.f32.mrf.mxu0
  %v261 = vadd.f32 %v201, %v260
  %v262 = vand.u32 %v63, 4294901760
  %v263 = vsub.f32 %v63, %v262
  %264 = vmatmul.f32.gmra.mxu0 %v263
  %v265 = vpop.f32.mrf.mxu0
  %v266 = vadd.f32 %v205, %v265
  %267 = vdwg.mxu0
  %268 = vmatpush.msra.mxu0 0.0
  %269 = vmatpush.msra.mxu0 0.0
  %270 = vmatpush.msra.mxu0 0.0
  %271 = vmatpush.msra.mxu0 0.0
  %272 = vmatpush.msra.mxu0 0.0
  %273 = vmatpush.msra.mxu0 0.0
  %274 = vmatpush.msra.mxu0 0.0
  %275 = vmatpush.msra.mxu0 0.0
  %276 = vmatpush.msra.mxu0 0.0
  %277 = vmatpush.msra.mxu0 0.0
  %278 = vmatpush.msra.mxu0 0.0
  %279 = vmatpush.msra.mxu0 0.0
  %280 = vmatpush.msra.mxu0 0.0
  %281 = vmatpush.msra.mxu0 0.0
  %v282 = vand.u32 %v35, 4294901760
  %283 = vmatpush.msra.mxu0 %v282
  %v284 = vand.u32 %v34, 4294901760
  %285 = vmatpush.msra.mxu0 %v284
  %v286 = vand.u32 %v42, 4294901760
  %v287 = vsub.f32 %v42, %v286
  %v288 = vand.u32 %v287, 4294901760
  %289 = vmatmul.f32.gmra.mxu0 %v288
  %v290 = vpop.f32.mrf.mxu0
  %v291 = vadd.f32 %v231, %v290
  %v292 = vand.u32 %v45, 4294901760
  %v293 = vsub.f32 %v45, %v292
  %v294 = vand.u32 %v293, 4294901760
  %295 = vmatmul.f32.gmra.mxu0 %v294
  %v296 = vpop.f32.mrf.mxu0
  %v297 = vadd.f32 %v236, %v296
  %v298 = vand.u32 %v48, 4294901760
  %v299 = vsub.f32 %v48, %v298
  %v300 = vand.u32 %v299, 4294901760
  %301 = vmatmul.f32.gmra.mxu0 %v300
  %v302 = vpop.f32.mrf.mxu0
  %v303 = vadd.f32 %v241, %v302
  %v304 = vand.u32 %v51, 4294901760
  %v305 = vsub.f32 %v51, %v304
  %v306 = vand.u32 %v305, 4294901760
  %307 = vmatmul.f32.gmra.mxu0 %v306
  %v308 = vpop.f32.mrf.mxu0
  %v309 = vadd.f32 %v246, %v308
  %v310 = vand.u32 %v54, 4294901760
  %v311 = vsub.f32 %v54, %v310
  %v312 = vand.u32 %v311, 4294901760
  %313 = vmatmul.f32.gmra.mxu0 %v312
  %v314 = vpop.f32.mrf.mxu0
  %v315 = vadd.f32 %v251, %v314
  %v316 = vand.u32 %v57, 4294901760
  %v317 = vsub.f32 %v57, %v316
  %v318 = vand.u32 %v317, 4294901760
  %319 = vmatmul.f32.gmra.mxu0 %v318
  %v320 = vpop.f32.mrf.mxu0
  %v321 = vadd.f32 %v256, %v320
  %v322 = vand.u32 %v60, 4294901760
  %v323 = vsub.f32 %v60, %v322
  %v324 = vand.u32 %v323, 4294901760
  %325 = vmatmul.f32.gmra.mxu0 %v324
  %v326 = vpop.f32.mrf.mxu0
  %v327 = vadd.f32 %v261, %v326
  %v328 = vand.u32 %v63, 4294901760
  %v329 = vsub.f32 %v63, %v328
  %v330 = vand.u32 %v329, 4294901760
  %331 = vmatmul.f32.gmra.mxu0 %v330
  %v332 = vpop.f32.mrf.mxu0
  %v333 = vadd.f32 %v266, %v332
  %334 = vdwg.mxu0
  %335 = vmatpush.msra.mxu0 0.0
  %336 = vmatpush.msra.mxu0 0.0
  %337 = vmatpush.msra.mxu0 0.0
  %338 = vmatpush.msra.mxu0 0.0
  %339 = vmatpush.msra.mxu0 0.0
  %340 = vmatpush.msra.mxu0 0.0
  %341 = vmatpush.msra.mxu0 0.0
  %342 = vmatpush.msra.mxu0 0.0
  %343 = vmatpush.msra.mxu0 0.0
  %344 = vmatpush.msra.mxu0 0.0
  %345 = vmatpush.msra.mxu0 0.0
  %346 = vmatpush.msra.mxu0 0.0
  %347 = vmatpush.msra.mxu0 0.0
  %348 = vmatpush.msra.mxu0 0.0
  %v349 = vand.u32 %v35, 4294901760
  %v350 = vsub.f32 %v35, %v349
  %v351 = vand.u32 %v350, 4294901760
  %352 = vmatpush.msra.mxu0 %v351
  %v353 = vand.u32 %v34, 4294901760
  %v354 = vsub.f32 %v34, %v353
  %v355 = vand.u32 %v354, 4294901760
  %356 = vmatpush.msra.mxu0 %v355
  %v357 = vand.u32 %v42, 4294901760
  %358 = vmatmul.f32.gmra.mxu0 %v357
  %v359 = vpop.f32.mrf.mxu0
  %v360 = vadd.f32 %v291, %v359
  %v361 = vand.u32 %v45, 4294901760
  %362 = vmatmul.f32.gmra.mxu0 %v361
  %v363 = vpop.f32.mrf.mxu0
  %v364 = vadd.f32 %v297, %v363
  %v365 = vand.u32 %v48, 4294901760
  %366 = vmatmul.f32.gmra.mxu0 %v365
  %v367 = vpop.f32.mrf.mxu0
  %v368 = vadd.f32 %v303, %v367
  %v369 = vand.u32 %v51, 4294901760
  %370 = vmatmul.f32.gmra.mxu0 %v369
  %v371 = vpop.f32.mrf.mxu0
  %v372 = vadd.f32 %v309, %v371
  %v373 = vand.u32 %v54, 4294901760
  %374 = vmatmul.f32.gmra.mxu0 %v373
  %v375 = vpop.f32.mrf.mxu0
  %v376 = vadd.f32 %v315, %v375
  %v377 = vand.u32 %v57, 4294901760
  %378 = vmatmul.f32.gmra.mxu0 %v377
  %v379 = vpop.f32.mrf.mxu0
  %v380 = vadd.f32 %v321, %v379
  %v381 = vand.u32 %v60, 4294901760
  %382 = vmatmul.f32.gmra.mxu0 %v381
  %v383 = vpop.f32.mrf.mxu0
  %v384 = vadd.f32 %v327, %v383
  %v385 = vand.u32 %v63, 4294901760
  %386 = vmatmul.f32.gmra.mxu0 %v385
  %v387 = vpop.f32.mrf.mxu0
  %v388 = vadd.f32 %v333, %v387
  %389 = vdwg.mxu0
  %390 = vmatpush.msra.mxu0 0.0
  %391 = vmatpush.msra.mxu0 0.0
  %392 = vmatpush.msra.mxu0 0.0
  %393 = vmatpush.msra.mxu0 0.0
  %394 = vmatpush.msra.mxu0 0.0
  %395 = vmatpush.msra.mxu0 0.0
  %396 = vmatpush.msra.mxu0 0.0
  %397 = vmatpush.msra.mxu0 0.0
  %398 = vmatpush.msra.mxu0 0.0
  %399 = vmatpush.msra.mxu0 0.0
  %400 = vmatpush.msra.mxu0 0.0
  %401 = vmatpush.msra.mxu0 0.0
  %402 = vmatpush.msra.mxu0 0.0
  %403 = vmatpush.msra.mxu0 0.0
  %v404 = vand.u32 %v35, 4294901760
  %405 = vmatpush.msra.mxu0 %v404
  %v406 = vand.u32 %v34, 4294901760
  %407 = vmatpush.msra.mxu0 %v406
  %v408 = vand.u32 %v42, 4294901760
  %409 = vmatmul.f32.gmra.mxu0 %v408
  %v410 = vpop.f32.mrf.mxu0
  %v411 = vadd.f32 %v360, %v410
  %v412 = vand.u32 %v45, 4294901760
  %413 = vmatmul.f32.gmra.mxu0 %v412
  %v414 = vpop.f32.mrf.mxu0
  %v415 = vadd.f32 %v364, %v414
  %v416 = vand.u32 %v48, 4294901760
  %417 = vmatmul.f32.gmra.mxu0 %v416
  %v418 = vpop.f32.mrf.mxu0
  %v419 = vadd.f32 %v368, %v418
  %v420 = vand.u32 %v51, 4294901760
  %421 = vmatmul.f32.gmra.mxu0 %v420
  %v422 = vpop.f32.mrf.mxu0
  %v423 = vadd.f32 %v372, %v422
  %v424 = vand.u32 %v54, 4294901760
  %425 = vmatmul.f32.gmra.mxu0 %v424
  %v426 = vpop.f32.mrf.mxu0
  %v427 = vadd.f32 %v376, %v426
  %v428 = vand.u32 %v57, 4294901760
  %429 = vmatmul.f32.gmra.mxu0 %v428
  %v430 = vpop.f32.mrf.mxu0
  %v431 = vadd.f32 %v380, %v430
  %v432 = vand.u32 %v60, 4294901760
  %433 = vmatmul.f32.gmra.mxu0 %v432
  %v434 = vpop.f32.mrf.mxu0
  %v435 = vadd.f32 %v384, %v434
  %v436 = vand.u32 %v63, 4294901760
  %437 = vmatmul.f32.gmra.mxu0 %v436
  %v438 = vpop.f32.mrf.mxu0
  %v439 = vadd.f32 %v388, %v438
  %440 = vdwg.mxu0
  %vm441 = vcmp.ge.f32.partialorder %v411, 0.0
  %vm442 = vcmp.ge.f32.partialorder %v415, 0.0
  %vm443 = vcmp.ge.f32.partialorder %v419, 0.0
  %vm444 = vcmp.ge.f32.partialorder %v423, 0.0
  %vm445 = vcmp.ge.f32.partialorder %v427, 0.0
  %vm446 = vcmp.ge.f32.partialorder %v431, 0.0
  %vm447 = vcmp.ge.f32.partialorder %v435, 0.0
  %vm448 = vcmp.ge.f32.partialorder %v439, 0.0
  %v449 = vmul.f32 %v411, 0.01
  %v450 = vmul.f32 %v415, 0.01
  %v451 = vmul.f32 %v419, 0.01
  %v452 = vmul.f32 %v423, 0.01
  %v453 = vmul.f32 %v427, 0.01
  %v454 = vmul.f32 %v431, 0.01
  %v455 = vmul.f32 %v435, 0.01
  %v456 = vmul.f32 %v439, 0.01
  %v457 = vsel %vm441, %v411, %v449
  %v458 = vsel %vm442, %v415, %v450
  %v459 = vsel %vm443, %v419, %v451
  %v460 = vsel %vm444, %v423, %v452
  %v461 = vsel %vm445, %v427, %v453
  %v462 = vsel %vm446, %v431, %v454
  %v463 = vsel %vm447, %v435, %v455
  %v464 = vsel %vm448, %v439, %v456
  %v465 = vld [vmem:[%s3] sm:$0xff]
  %v466 = vld [vmem:[%s3 + $0x8] sm:$0xff]
  %v467 = vld [vmem:[%s3 + $0x10] sm:$0xff]
  %v468 = vld [vmem:[%s3 + $0x18] sm:$0xff]
  %v469 = vld [vmem:[%s4] sm:$0x1]
  %v471 = vperm.slane %v469, 0
  %vm473 = vcmask 261120
  %v475 = vsel %vm473, %v457, 0
  %v478 = vsel %vm473, %v458, 0
  %v481 = vsel %vm473, %v459, 0
  %v484 = vsel %vm473, %v460, 0
  %v487 = vsel %vm473, %v461, 0
  %v490 = vsel %vm473, %v462, 0
  %v493 = vsel %vm473, %v463, 0
  %v496 = vsel %vm473, %v464, 0
  %498 = vmatpush.msra.mxu0 0.0
  %499 = vmatpush.msra.mxu0 0.0
  %500 = vmatpush.msra.mxu0 0.0
  %501 = vmatpush.msra.mxu0 0.0
  %502 = vmatpush.msra.mxu0 0.0
  %503 = vmatpush.msra.mxu0 0.0
  %504 = vmatpush.msra.mxu0 0.0
  %505 = vmatpush.msra.mxu0 0.0
  %506 = vmatpush.msra.mxu0 0.0
  %507 = vmatpush.msra.mxu0 0.0
  %508 = vmatpush.msra.mxu0 0.0
  %509 = vmatpush.msra.mxu0 0.0
  %v510 = vand.u32 %v468, 4294901760
  %511 = vmatpush.msra.mxu0 %v510
  %v512 = vand.u32 %v467, 4294901760
  %513 = vmatpush.msra.mxu0 %v512
  %v514 = vand.u32 %v466, 4294901760
  %515 = vmatpush.msra.mxu0 %v514
  %v516 = vand.u32 %v465, 4294901760
  %517 = vmatpush.msra.mxu0 %v516
  %v518 = vand.u32 %v475, 4294901760
  %v519 = vsub.f32 %v475, %v518
  %v520 = vand.u32 %v519, 4294901760
  %v521 = vsub.f32 %v519, %v520
  %v522 = vand.u32 %v521, 4294901760
  %523 = vmatmul.f32.gmra.mxu0 %v522
  %v524 = vpop.f32.mrf.mxu0
  %v525 = vadd.f32 %v471, %v524
  %v526 = vand.u32 %v478, 4294901760
  %v527 = vsub.f32 %v478, %v526
  %v528 = vand.u32 %v527, 4294901760
  %v529 = vsub.f32 %v527, %v528
  %v530 = vand.u32 %v529, 4294901760
  %531 = vmatmul.f32.gmra.mxu0 %v530
  %v532 = vpop.f32.mrf.mxu0
  %v533 = vadd.f32 %v471, %v532
  %v534 = vand.u32 %v481, 4294901760
  %v535 = vsub.f32 %v481, %v534
  %v536 = vand.u32 %v535, 4294901760
  %v537 = vsub.f32 %v535, %v536
  %v538 = vand.u32 %v537, 4294901760
  %539 = vmatmul.f32.gmra.mxu0 %v538
  %v540 = vpop.f32.mrf.mxu0
  %v541 = vadd.f32 %v471, %v540
  %v542 = vand.u32 %v484, 4294901760
  %v543 = vsub.f32 %v484, %v542
  %v544 = vand.u32 %v543, 4294901760
  %v545 = vsub.f32 %v543, %v544
  %v546 = vand.u32 %v545, 4294901760
  %547 = vmatmul.f32.gmra.mxu0 %v546
  %v548 = vpop.f32.mrf.mxu0
  %v549 = vadd.f32 %v471, %v548
  %v550 = vand.u32 %v487, 4294901760
  %v551 = vsub.f32 %v487, %v550
  %v552 = vand.u32 %v551, 4294901760
  %v553 = vsub.f32 %v551, %v552
  %v554 = vand.u32 %v553, 4294901760
  %555 = vmatmul.f32.gmra.mxu0 %v554
  %v556 = vpop.f32.mrf.mxu0
  %v557 = vadd.f32 %v471, %v556
  %v558 = vand.u32 %v490, 4294901760
  %v559 = vsub.f32 %v490, %v558
  %v560 = vand.u32 %v559, 4294901760
  %v561 = vsub.f32 %v559, %v560
  %v562 = vand.u32 %v561, 4294901760
  %563 = vmatmul.f32.gmra.mxu0 %v562
  %v564 = vpop.f32.mrf.mxu0
  %v565 = vadd.f32 %v471, %v564
  %v566 = vand.u32 %v493, 4294901760
  %v567 = vsub.f32 %v493, %v566
  %v568 = vand.u32 %v567, 4294901760
  %v569 = vsub.f32 %v567, %v568
  %v570 = vand.u32 %v569, 4294901760
  %571 = vmatmul.f32.gmra.mxu0 %v570
  %v572 = vpop.f32.mrf.mxu0
  %v573 = vadd.f32 %v471, %v572
  %v574 = vand.u32 %v496, 4294901760
  %v575 = vsub.f32 %v496, %v574
  %v576 = vand.u32 %v575, 4294901760
  %v577 = vsub.f32 %v575, %v576
  %v578 = vand.u32 %v577, 4294901760
  %579 = vmatmul.f32.gmra.mxu0 %v578
  %v580 = vpop.f32.mrf.mxu0
  %v581 = vadd.f32 %v471, %v580
  %582 = vdwg.mxu0
  %583 = vmatpush.msra.mxu0 0.0
  %584 = vmatpush.msra.mxu0 0.0
  %585 = vmatpush.msra.mxu0 0.0
  %586 = vmatpush.msra.mxu0 0.0
  %587 = vmatpush.msra.mxu0 0.0
  %588 = vmatpush.msra.mxu0 0.0
  %589 = vmatpush.msra.mxu0 0.0
  %590 = vmatpush.msra.mxu0 0.0
  %591 = vmatpush.msra.mxu0 0.0
  %592 = vmatpush.msra.mxu0 0.0
  %593 = vmatpush.msra.mxu0 0.0
  %594 = vmatpush.msra.mxu0 0.0
  %v595 = vand.u32 %v468, 4294901760
  %v596 = vsub.f32 %v468, %v595
  %v597 = vand.u32 %v596, 4294901760
  %v598 = vsub.f32 %v596, %v597
  %v599 = vand.u32 %v598, 4294901760
  %600 = vmatpush.msra.mxu0 %v599
  %v601 = vand.u32 %v467, 4294901760
  %v602 = vsub.f32 %v467, %v601
  %v603 = vand.u32 %v602, 4294901760
  %v604 = vsub.f32 %v602, %v603
  %v605 = vand.u32 %v604, 4294901760
  %606 = vmatpush.msra.mxu0 %v605
  %v607 = vand.u32 %v466, 4294901760
  %v608 = vsub.f32 %v466, %v607
  %v609 = vand.u32 %v608, 4294901760
  %v610 = vsub.f32 %v608, %v609
  %v611 = vand.u32 %v610, 4294901760
  %612 = vmatpush.msra.mxu0 %v611
  %v613 = vand.u32 %v465, 4294901760
  %v614 = vsub.f32 %v465, %v613
  %v615 = vand.u32 %v614, 4294901760
  %v616 = vsub.f32 %v614, %v615
  %v617 = vand.u32 %v616, 4294901760
  %618 = vmatpush.msra.mxu0 %v617
  %v619 = vand.u32 %v475, 4294901760
  %620 = vmatmul.f32.gmra.mxu0 %v619
  %v621 = vpop.f32.mrf.mxu0
  %v622 = vadd.f32 %v525, %v621
  %v623 = vand.u32 %v478, 4294901760
  %624 = vmatmul.f32.gmra.mxu0 %v623
  %v625 = vpop.f32.mrf.mxu0
  %v626 = vadd.f32 %v533, %v625
  %v627 = vand.u32 %v481, 4294901760
  %628 = vmatmul.f32.gmra.mxu0 %v627
  %v629 = vpop.f32.mrf.mxu0
  %v630 = vadd.f32 %v541, %v629
  %v631 = vand.u32 %v484, 4294901760
  %632 = vmatmul.f32.gmra.mxu0 %v631
  %v633 = vpop.f32.mrf.mxu0
  %v634 = vadd.f32 %v549, %v633
  %v635 = vand.u32 %v487, 4294901760
  %636 = vmatmul.f32.gmra.mxu0 %v635
  %v637 = vpop.f32.mrf.mxu0
  %v638 = vadd.f32 %v557, %v637
  %v639 = vand.u32 %v490, 4294901760
  %640 = vmatmul.f32.gmra.mxu0 %v639
  %v641 = vpop.f32.mrf.mxu0
  %v642 = vadd.f32 %v565, %v641
  %v643 = vand.u32 %v493, 4294901760
  %644 = vmatmul.f32.gmra.mxu0 %v643
  %v645 = vpop.f32.mrf.mxu0
  %v646 = vadd.f32 %v573, %v645
  %v647 = vand.u32 %v496, 4294901760
  %648 = vmatmul.f32.gmra.mxu0 %v647
  %v649 = vpop.f32.mrf.mxu0
  %v650 = vadd.f32 %v581, %v649
  %651 = vdwg.mxu0
  %652 = vmatpush.msra.mxu0 0.0
  %653 = vmatpush.msra.mxu0 0.0
  %654 = vmatpush.msra.mxu0 0.0
  %655 = vmatpush.msra.mxu0 0.0
  %656 = vmatpush.msra.mxu0 0.0
  %657 = vmatpush.msra.mxu0 0.0
  %658 = vmatpush.msra.mxu0 0.0
  %659 = vmatpush.msra.mxu0 0.0
  %660 = vmatpush.msra.mxu0 0.0
  %661 = vmatpush.msra.mxu0 0.0
  %662 = vmatpush.msra.mxu0 0.0
  %663 = vmatpush.msra.mxu0 0.0
  %v664 = vand.u32 %v468, 4294901760
  %v665 = vsub.f32 %v468, %v664
  %666 = vmatpush.msra.mxu0 %v665
  %v667 = vand.u32 %v467, 4294901760
  %v668 = vsub.f32 %v467, %v667
  %669 = vmatpush.msra.mxu0 %v668
  %v670 = vand.u32 %v466, 4294901760
  %v671 = vsub.f32 %v466, %v670
  %672 = vmatpush.msra.mxu0 %v671
  %v673 = vand.u32 %v465, 4294901760
  %v674 = vsub.f32 %v465, %v673
  %675 = vmatpush.msra.mxu0 %v674
  %v676 = vand.u32 %v475, 4294901760
  %v677 = vsub.f32 %v475, %v676
  %678 = vmatmul.f32.gmra.mxu0 %v677
  %v679 = vpop.f32.mrf.mxu0
  %v680 = vadd.f32 %v622, %v679
  %v681 = vand.u32 %v478, 4294901760
  %v682 = vsub.f32 %v478, %v681
  %683 = vmatmul.f32.gmra.mxu0 %v682
  %v684 = vpop.f32.mrf.mxu0
  %v685 = vadd.f32 %v626, %v684
  %v686 = vand.u32 %v481, 4294901760
  %v687 = vsub.f32 %v481, %v686
  %688 = vmatmul.f32.gmra.mxu0 %v687
  %v689 = vpop.f32.mrf.mxu0
  %v690 = vadd.f32 %v630, %v689
  %v691 = vand.u32 %v484, 4294901760
  %v692 = vsub.f32 %v484, %v691
  %693 = vmatmul.f32.gmra.mxu0 %v692
  %v694 = vpop.f32.mrf.mxu0
  %v695 = vadd.f32 %v634, %v694
  %v696 = vand.u32 %v487, 4294901760
  %v697 = vsub.f32 %v487, %v696
  %698 = vmatmul.f32.gmra.mxu0 %v697
  %v699 = vpop.f32.mrf.mxu0
  %v700 = vadd.f32 %v638, %v699
  %v701 = vand.u32 %v490, 4294901760
  %v702 = vsub.f32 %v490, %v701
  %703 = vmatmul.f32.gmra.mxu0 %v702
  %v704 = vpop.f32.mrf.mxu0
  %v705 = vadd.f32 %v642, %v704
  %v706 = vand.u32 %v493, 4294901760
  %v707 = vsub.f32 %v493, %v706
  %708 = vmatmul.f32.gmra.mxu0 %v707
  %v709 = vpop.f32.mrf.mxu0
  %v710 = vadd.f32 %v646, %v709
  %v711 = vand.u32 %v496, 4294901760
  %v712 = vsub.f32 %v496, %v711
  %713 = vmatmul.f32.gmra.mxu0 %v712
  %v714 = vpop.f32.mrf.mxu0
  %v715 = vadd.f32 %v650, %v714
  %716 = vdwg.mxu0
  %717 = vmatpush.msra.mxu0 0.0
  %718 = vmatpush.msra.mxu0 0.0
  %719 = vmatpush.msra.mxu0 0.0
  %720 = vmatpush.msra.mxu0 0.0
  %721 = vmatpush.msra.mxu0 0.0
  %722 = vmatpush.msra.mxu0 0.0
  %723 = vmatpush.msra.mxu0 0.0
  %724 = vmatpush.msra.mxu0 0.0
  %725 = vmatpush.msra.mxu0 0.0
  %726 = vmatpush.msra.mxu0 0.0
  %727 = vmatpush.msra.mxu0 0.0
  %728 = vmatpush.msra.mxu0 0.0
  %v729 = vand.u32 %v468, 4294901760
  %730 = vmatpush.msra.mxu0 %v729
  %v731 = vand.u32 %v467, 4294901760
  %732 = vmatpush.msra.mxu0 %v731
  %v733 = vand.u32 %v466, 4294901760
  %734 = vmatpush.msra.mxu0 %v733
  %v735 = vand.u32 %v465, 4294901760
  %736 = vmatpush.msra.mxu0 %v735
  %v737 = vand.u32 %v475, 4294901760
  %v738 = vsub.f32 %v475, %v737
  %v739 = vand.u32 %v738, 4294901760
  %740 = vmatmul.f32.gmra.mxu0 %v739
  %v741 = vpop.f32.mrf.mxu0
  %v742 = vadd.f32 %v680, %v741
  %v743 = vand.u32 %v478, 4294901760
  %v744 = vsub.f32 %v478, %v743
  %v745 = vand.u32 %v744, 4294901760
  %746 = vmatmul.f32.gmra.mxu0 %v745
  %v747 = vpop.f32.mrf.mxu0
  %v748 = vadd.f32 %v685, %v747
  %v749 = vand.u32 %v481, 4294901760
  %v750 = vsub.f32 %v481, %v749
  %v751 = vand.u32 %v750, 4294901760
  %752 = vmatmul.f32.gmra.mxu0 %v751
  %v753 = vpop.f32.mrf.mxu0
  %v754 = vadd.f32 %v690, %v753
  %v755 = vand.u32 %v484, 4294901760
  %v756 = vsub.f32 %v484, %v755
  %v757 = vand.u32 %v756, 4294901760
  %758 = vmatmul.f32.gmra.mxu0 %v757
  %v759 = vpop.f32.mrf.mxu0
  %v760 = vadd.f32 %v695, %v759
  %v761 = vand.u32 %v487, 4294901760
  %v762 = vsub.f32 %v487, %v761
  %v763 = vand.u32 %v762, 4294901760
  %764 = vmatmul.f32.gmra.mxu0 %v763
  %v765 = vpop.f32.mrf.mxu0
  %v766 = vadd.f32 %v700, %v765
  %v767 = vand.u32 %v490, 4294901760
  %v768 = vsub.f32 %v490, %v767
  %v769 = vand.u32 %v768, 4294901760
  %770 = vmatmul.f32.gmra.mxu0 %v769
  %v771 = vpop.f32.mrf.mxu0
  %v772 = vadd.f32 %v705, %v771
  %v773 = vand.u32 %v493, 4294901760
  %v774 = vsub.f32 %v493, %v773
  %v775 = vand.u32 %v774, 4294901760
  %776 = vmatmul.f32.gmra.mxu0 %v775
  %v777 = vpop.f32.mrf.mxu0
  %v778 = vadd.f32 %v710, %v777
  %v779 = vand.u32 %v496, 4294901760
  %v780 = vsub.f32 %v496, %v779
  %v781 = vand.u32 %v780, 4294901760
  %782 = vmatmul.f32.gmra.mxu0 %v781
  %v783 = vpop.f32.mrf.mxu0
  %v784 = vadd.f32 %v715, %v783
  %785 = vdwg.mxu0
  %786 = vmatpush.msra.mxu0 0.0
  %787 = vmatpush.msra.mxu0 0.0
  %788 = vmatpush.msra.mxu0 0.0
  %789 = vmatpush.msra.mxu0 0.0
  %790 = vmatpush.msra.mxu0 0.0
  %791 = vmatpush.msra.mxu0 0.0
  %792 = vmatpush.msra.mxu0 0.0
  %793 = vmatpush.msra.mxu0 0.0
  %794 = vmatpush.msra.mxu0 0.0
  %795 = vmatpush.msra.mxu0 0.0
  %796 = vmatpush.msra.mxu0 0.0
  %797 = vmatpush.msra.mxu0 0.0
  %v798 = vand.u32 %v468, 4294901760
  %v799 = vsub.f32 %v468, %v798
  %v800 = vand.u32 %v799, 4294901760
  %801 = vmatpush.msra.mxu0 %v800
  %v802 = vand.u32 %v467, 4294901760
  %v803 = vsub.f32 %v467, %v802
  %v804 = vand.u32 %v803, 4294901760
  %805 = vmatpush.msra.mxu0 %v804
  %v806 = vand.u32 %v466, 4294901760
  %v807 = vsub.f32 %v466, %v806
  %v808 = vand.u32 %v807, 4294901760
  %809 = vmatpush.msra.mxu0 %v808
  %v810 = vand.u32 %v465, 4294901760
  %v811 = vsub.f32 %v465, %v810
  %v812 = vand.u32 %v811, 4294901760
  %813 = vmatpush.msra.mxu0 %v812
  %v814 = vand.u32 %v475, 4294901760
  %815 = vmatmul.f32.gmra.mxu0 %v814
  %v816 = vpop.f32.mrf.mxu0
  %v817 = vadd.f32 %v742, %v816
  %v818 = vand.u32 %v478, 4294901760
  %819 = vmatmul.f32.gmra.mxu0 %v818
  %v820 = vpop.f32.mrf.mxu0
  %v821 = vadd.f32 %v748, %v820
  %v822 = vand.u32 %v481, 4294901760
  %823 = vmatmul.f32.gmra.mxu0 %v822
  %v824 = vpop.f32.mrf.mxu0
  %v825 = vadd.f32 %v754, %v824
  %v826 = vand.u32 %v484, 4294901760
  %827 = vmatmul.f32.gmra.mxu0 %v826
  %v828 = vpop.f32.mrf.mxu0
  %v829 = vadd.f32 %v760, %v828
  %v830 = vand.u32 %v487, 4294901760
  %831 = vmatmul.f32.gmra.mxu0 %v830
  %v832 = vpop.f32.mrf.mxu0
  %v833 = vadd.f32 %v766, %v832
  %v834 = vand.u32 %v490, 4294901760
  %835 = vmatmul.f32.gmra.mxu0 %v834
  %v836 = vpop.f32.mrf.mxu0
  %v837 = vadd.f32 %v772, %v836
  %v838 = vand.u32 %v493, 4294901760
  %839 = vmatmul.f32.gmra.mxu0 %v838
  %v840 = vpop.f32.mrf.mxu0
  %v841 = vadd.f32 %v778, %v840
  %v842 = vand.u32 %v496, 4294901760
  %843 = vmatmul.f32.gmra.mxu0 %v842
  %v844 = vpop.f32.mrf.mxu0
  %v845 = vadd.f32 %v784, %v844
  %846 = vdwg.mxu0
  %847 = vmatpush.msra.mxu0 0.0
  %848 = vmatpush.msra.mxu0 0.0
  %849 = vmatpush.msra.mxu0 0.0
  %850 = vmatpush.msra.mxu0 0.0
  %851 = vmatpush.msra.mxu0 0.0
  %852 = vmatpush.msra.mxu0 0.0
  %853 = vmatpush.msra.mxu0 0.0
  %854 = vmatpush.msra.mxu0 0.0
  %855 = vmatpush.msra.mxu0 0.0
  %856 = vmatpush.msra.mxu0 0.0
  %857 = vmatpush.msra.mxu0 0.0
  %858 = vmatpush.msra.mxu0 0.0
  %v859 = vand.u32 %v468, 4294901760
  %860 = vmatpush.msra.mxu0 %v859
  %v861 = vand.u32 %v467, 4294901760
  %862 = vmatpush.msra.mxu0 %v861
  %v863 = vand.u32 %v466, 4294901760
  %864 = vmatpush.msra.mxu0 %v863
  %v865 = vand.u32 %v465, 4294901760
  %866 = vmatpush.msra.mxu0 %v865
  %v867 = vand.u32 %v475, 4294901760
  %868 = vmatmul.f32.gmra.mxu0 %v867
  %v869 = vpop.f32.mrf.mxu0
  %v870 = vadd.f32 %v817, %v869
  %v871 = vand.u32 %v478, 4294901760
  %872 = vmatmul.f32.gmra.mxu0 %v871
  %v873 = vpop.f32.mrf.mxu0
  %v874 = vadd.f32 %v821, %v873
  %v875 = vand.u32 %v481, 4294901760
  %876 = vmatmul.f32.gmra.mxu0 %v875
  %v877 = vpop.f32.mrf.mxu0
  %v878 = vadd.f32 %v825, %v877
  %v879 = vand.u32 %v484, 4294901760
  %880 = vmatmul.f32.gmra.mxu0 %v879
  %v881 = vpop.f32.mrf.mxu0
  %v882 = vadd.f32 %v829, %v881
  %v883 = vand.u32 %v487, 4294901760
  %884 = vmatmul.f32.gmra.mxu0 %v883
  %v885 = vpop.f32.mrf.mxu0
  %v886 = vadd.f32 %v833, %v885
  %v887 = vand.u32 %v490, 4294901760
  %888 = vmatmul.f32.gmra.mxu0 %v887
  %v889 = vpop.f32.mrf.mxu0
  %v890 = vadd.f32 %v837, %v889
  %v891 = vand.u32 %v493, 4294901760
  %892 = vmatmul.f32.gmra.mxu0 %v891
  %v893 = vpop.f32.mrf.mxu0
  %v894 = vadd.f32 %v841, %v893
  %v895 = vand.u32 %v496, 4294901760
  %896 = vmatmul.f32.gmra.mxu0 %v895
  %v897 = vpop.f32.mrf.mxu0
  %v898 = vadd.f32 %v845, %v897
  %899 = vdwg.mxu0
  %vm900 = vcmp.ge.f32.partialorder %v870, 0.0
  %vm901 = vcmp.ge.f32.partialorder %v874, 0.0
  %vm902 = vcmp.ge.f32.partialorder %v878, 0.0
  %vm903 = vcmp.ge.f32.partialorder %v882, 0.0
  %vm904 = vcmp.ge.f32.partialorder %v886, 0.0
  %vm905 = vcmp.ge.f32.partialorder %v890, 0.0
  %vm906 = vcmp.ge.f32.partialorder %v894, 0.0
  %vm907 = vcmp.ge.f32.partialorder %v898, 0.0
  %v908 = vmul.f32 %v870, 0.01
  %v909 = vmul.f32 %v874, 0.01
  %v910 = vmul.f32 %v878, 0.01
  %v911 = vmul.f32 %v882, 0.01
  %v912 = vmul.f32 %v886, 0.01
  %v913 = vmul.f32 %v890, 0.01
  %v914 = vmul.f32 %v894, 0.01
  %v915 = vmul.f32 %v898, 0.01
  %v916 = vsel %vm900, %v870, %v908
  %v917 = vsel %vm901, %v874, %v909
  %v918 = vsel %vm902, %v878, %v910
  %v919 = vsel %vm903, %v882, %v911
  %v920 = vsel %vm904, %v886, %v912
  %v921 = vsel %vm905, %v890, %v913
  %v922 = vsel %vm906, %v894, %v914
  %v923 = vsel %vm907, %v898, %v915
  %v924 = vld [vmem:[%s5] sm:$0xff]
  %v925 = vld [vmem:[%s5 + $0x8] sm:$0xff]
  %v926 = vld [vmem:[%s5 + $0x10] sm:$0xff]
  %v927 = vld [vmem:[%s5 + $0x18] sm:$0xff]
  %v928 = vld [vmem:[%s6] sm:$0x1]
  %v930 = vperm.slane %v928, 0
  %v933 = vsel %vm473, %v916, 0
  %v936 = vsel %vm473, %v917, 0
  %v939 = vsel %vm473, %v918, 0
  %v942 = vsel %vm473, %v919, 0
  %v945 = vsel %vm473, %v920, 0
  %v948 = vsel %vm473, %v921, 0
  %v951 = vsel %vm473, %v922, 0
  %v954 = vsel %vm473, %v923, 0
  %956 = vmatpush.msra.mxu0 0.0
  %957 = vmatpush.msra.mxu0 0.0
  %958 = vmatpush.msra.mxu0 0.0
  %959 = vmatpush.msra.mxu0 0.0
  %960 = vmatpush.msra.mxu0 0.0
  %961 = vmatpush.msra.mxu0 0.0
  %962 = vmatpush.msra.mxu0 0.0
  %963 = vmatpush.msra.mxu0 0.0
  %964 = vmatpush.msra.mxu0 0.0
  %965 = vmatpush.msra.mxu0 0.0
  %966 = vmatpush.msra.mxu0 0.0
  %967 = vmatpush.msra.mxu0 0.0
  %v968 = vand.u32 %v927, 4294901760
  %969 = vmatpush.msra.mxu0 %v968
  %v970 = vand.u32 %v926, 4294901760
  %971 = vmatpush.msra.mxu0 %v970
  %v972 = vand.u32 %v925, 4294901760
  %973 = vmatpush.msra.mxu0 %v972
  %v974 = vand.u32 %v924, 4294901760
  %975 = vmatpush.msra.mxu0 %v974
  %v976 = vand.u32 %v933, 4294901760
  %v977 = vsub.f32 %v933, %v976
  %v978 = vand.u32 %v977, 4294901760
  %v979 = vsub.f32 %v977, %v978
  %v980 = vand.u32 %v979, 4294901760
  %981 = vmatmul.f32.gmra.mxu0 %v980
  %v982 = vpop.f32.mrf.mxu0
  %v983 = vadd.f32 %v930, %v982
  %v984 = vand.u32 %v936, 4294901760
  %v985 = vsub.f32 %v936, %v984
  %v986 = vand.u32 %v985, 4294901760
  %v987 = vsub.f32 %v985, %v986
  %v988 = vand.u32 %v987, 4294901760
  %989 = vmatmul.f32.gmra.mxu0 %v988
  %v990 = vpop.f32.mrf.mxu0
  %v991 = vadd.f32 %v930, %v990
  %v992 = vand.u32 %v939, 4294901760
  %v993 = vsub.f32 %v939, %v992
  %v994 = vand.u32 %v993, 4294901760
  %v995 = vsub.f32 %v993, %v994
  %v996 = vand.u32 %v995, 4294901760
  %997 = vmatmul.f32.gmra.mxu0 %v996
  %v998 = vpop.f32.mrf.mxu0
  %v999 = vadd.f32 %v930, %v998
  %v1000 = vand.u32 %v942, 4294901760
  %v1001 = vsub.f32 %v942, %v1000
  %v1002 = vand.u32 %v1001, 4294901760
  %v1003 = vsub.f32 %v1001, %v1002
  %v1004 = vand.u32 %v1003, 4294901760
  %1005 = vmatmul.f32.gmra.mxu0 %v1004
  %v1006 = vpop.f32.mrf.mxu0
  %v1007 = vadd.f32 %v930, %v1006
  %v1008 = vand.u32 %v945, 4294901760
  %v1009 = vsub.f32 %v945, %v1008
  %v1010 = vand.u32 %v1009, 4294901760
  %v1011 = vsub.f32 %v1009, %v1010
  %v1012 = vand.u32 %v1011, 4294901760
  %1013 = vmatmul.f32.gmra.mxu0 %v1012
  %v1014 = vpop.f32.mrf.mxu0
  %v1015 = vadd.f32 %v930, %v1014
  %v1016 = vand.u32 %v948, 4294901760
  %v1017 = vsub.f32 %v948, %v1016
  %v1018 = vand.u32 %v1017, 4294901760
  %v1019 = vsub.f32 %v1017, %v1018
  %v1020 = vand.u32 %v1019, 4294901760
  %1021 = vmatmul.f32.gmra.mxu0 %v1020
  %v1022 = vpop.f32.mrf.mxu0
  %v1023 = vadd.f32 %v930, %v1022
  %v1024 = vand.u32 %v951, 4294901760
  %v1025 = vsub.f32 %v951, %v1024
  %v1026 = vand.u32 %v1025, 4294901760
  %v1027 = vsub.f32 %v1025, %v1026
  %v1028 = vand.u32 %v1027, 4294901760
  %1029 = vmatmul.f32.gmra.mxu0 %v1028
  %v1030 = vpop.f32.mrf.mxu0
  %v1031 = vadd.f32 %v930, %v1030
  %v1032 = vand.u32 %v954, 4294901760
  %v1033 = vsub.f32 %v954, %v1032
  %v1034 = vand.u32 %v1033, 4294901760
  %v1035 = vsub.f32 %v1033, %v1034
  %v1036 = vand.u32 %v1035, 4294901760
  %1037 = vmatmul.f32.gmra.mxu0 %v1036
  %v1038 = vpop.f32.mrf.mxu0
  %v1039 = vadd.f32 %v930, %v1038
  %1040 = vdwg.mxu0
  %1041 = vmatpush.msra.mxu0 0.0
  %1042 = vmatpush.msra.mxu0 0.0
  %1043 = vmatpush.msra.mxu0 0.0
  %1044 = vmatpush.msra.mxu0 0.0
  %1045 = vmatpush.msra.mxu0 0.0
  %1046 = vmatpush.msra.mxu0 0.0
  %1047 = vmatpush.msra.mxu0 0.0
  %1048 = vmatpush.msra.mxu0 0.0
  %1049 = vmatpush.msra.mxu0 0.0
  %1050 = vmatpush.msra.mxu0 0.0
  %1051 = vmatpush.msra.mxu0 0.0
  %1052 = vmatpush.msra.mxu0 0.0
  %v1053 = vand.u32 %v927, 4294901760
  %v1054 = vsub.f32 %v927, %v1053
  %v1055 = vand.u32 %v1054, 4294901760
  %v1056 = vsub.f32 %v1054, %v1055
  %v1057 = vand.u32 %v1056, 4294901760
  %1058 = vmatpush.msra.mxu0 %v1057
  %v1059 = vand.u32 %v926, 4294901760
  %v1060 = vsub.f32 %v926, %v1059
  %v1061 = vand.u32 %v1060, 4294901760
  %v1062 = vsub.f32 %v1060, %v1061
  %v1063 = vand.u32 %v1062, 4294901760
  %1064 = vmatpush.msra.mxu0 %v1063
  %v1065 = vand.u32 %v925, 4294901760
  %v1066 = vsub.f32 %v925, %v1065
  %v1067 = vand.u32 %v1066, 4294901760
  %v1068 = vsub.f32 %v1066, %v1067
  %v1069 = vand.u32 %v1068, 4294901760
  %1070 = vmatpush.msra.mxu0 %v1069
  %v1071 = vand.u32 %v924, 4294901760
  %v1072 = vsub.f32 %v924, %v1071
  %v1073 = vand.u32 %v1072, 4294901760
  %v1074 = vsub.f32 %v1072, %v1073
  %v1075 = vand.u32 %v1074, 4294901760
  %1076 = vmatpush.msra.mxu0 %v1075
  %v1077 = vand.u32 %v933, 4294901760
  %1078 = vmatmul.f32.gmra.mxu0 %v1077
  %v1079 = vpop.f32.mrf.mxu0
  %v1080 = vadd.f32 %v983, %v1079
  %v1081 = vand.u32 %v936, 4294901760
  %1082 = vmatmul.f32.gmra.mxu0 %v1081
  %v1083 = vpop.f32.mrf.mxu0
  %v1084 = vadd.f32 %v991, %v1083
  %v1085 = vand.u32 %v939, 4294901760
  %1086 = vmatmul.f32.gmra.mxu0 %v1085
  %v1087 = vpop.f32.mrf.mxu0
  %v1088 = vadd.f32 %v999, %v1087
  %v1089 = vand.u32 %v942, 4294901760
  %1090 = vmatmul.f32.gmra.mxu0 %v1089
  %v1091 = vpop.f32.mrf.mxu0
  %v1092 = vadd.f32 %v1007, %v1091
  %v1093 = vand.u32 %v945, 4294901760
  %1094 = vmatmul.f32.gmra.mxu0 %v1093
  %v1095 = vpop.f32.mrf.mxu0
  %v1096 = vadd.f32 %v1015, %v1095
  %v1097 = vand.u32 %v948, 4294901760
  %1098 = vmatmul.f32.gmra.mxu0 %v1097
  %v1099 = vpop.f32.mrf.mxu0
  %v1100 = vadd.f32 %v1023, %v1099
  %v1101 = vand.u32 %v951, 4294901760
  %1102 = vmatmul.f32.gmra.mxu0 %v1101
  %v1103 = vpop.f32.mrf.mxu0
  %v1104 = vadd.f32 %v1031, %v1103
  %v1105 = vand.u32 %v954, 4294901760
  %1106 = vmatmul.f32.gmra.mxu0 %v1105
  %v1107 = vpop.f32.mrf.mxu0
  %v1108 = vadd.f32 %v1039, %v1107
  %1109 = vdwg.mxu0
  %1110 = vmatpush.msra.mxu0 0.0
  %1111 = vmatpush.msra.mxu0 0.0
  %1112 = vmatpush.msra.mxu0 0.0
  %1113 = vmatpush.msra.mxu0 0.0
  %1114 = vmatpush.msra.mxu0 0.0
  %1115 = vmatpush.msra.mxu0 0.0
  %1116 = vmatpush.msra.mxu0 0.0
  %1117 = vmatpush.msra.mxu0 0.0
  %1118 = vmatpush.msra.mxu0 0.0
  %1119 = vmatpush.msra.mxu0 0.0
  %1120 = vmatpush.msra.mxu0 0.0
  %1121 = vmatpush.msra.mxu0 0.0
  %v1122 = vand.u32 %v927, 4294901760
  %v1123 = vsub.f32 %v927, %v1122
  %1124 = vmatpush.msra.mxu0 %v1123
  %v1125 = vand.u32 %v926, 4294901760
  %v1126 = vsub.f32 %v926, %v1125
  %1127 = vmatpush.msra.mxu0 %v1126
  %v1128 = vand.u32 %v925, 4294901760
  %v1129 = vsub.f32 %v925, %v1128
  %1130 = vmatpush.msra.mxu0 %v1129
  %v1131 = vand.u32 %v924, 4294901760
  %v1132 = vsub.f32 %v924, %v1131
  %1133 = vmatpush.msra.mxu0 %v1132
  %v1134 = vand.u32 %v933, 4294901760
  %v1135 = vsub.f32 %v933, %v1134
  %1136 = vmatmul.f32.gmra.mxu0 %v1135
  %v1137 = vpop.f32.mrf.mxu0
  %v1138 = vadd.f32 %v1080, %v1137
  %v1139 = vand.u32 %v936, 4294901760
  %v1140 = vsub.f32 %v936, %v1139
  %1141 = vmatmul.f32.gmra.mxu0 %v1140
  %v1142 = vpop.f32.mrf.mxu0
  %v1143 = vadd.f32 %v1084, %v1142
  %v1144 = vand.u32 %v939, 4294901760
  %v1145 = vsub.f32 %v939, %v1144
  %1146 = vmatmul.f32.gmra.mxu0 %v1145
  %v1147 = vpop.f32.mrf.mxu0
  %v1148 = vadd.f32 %v1088, %v1147
  %v1149 = vand.u32 %v942, 4294901760
  %v1150 = vsub.f32 %v942, %v1149
  %1151 = vmatmul.f32.gmra.mxu0 %v1150
  %v1152 = vpop.f32.mrf.mxu0
  %v1153 = vadd.f32 %v1092, %v1152
  %v1154 = vand.u32 %v945, 4294901760
  %v1155 = vsub.f32 %v945, %v1154
  %1156 = vmatmul.f32.gmra.mxu0 %v1155
  %v1157 = vpop.f32.mrf.mxu0
  %v1158 = vadd.f32 %v1096, %v1157
  %v1159 = vand.u32 %v948, 4294901760
  %v1160 = vsub.f32 %v948, %v1159
  %1161 = vmatmul.f32.gmra.mxu0 %v1160
  %v1162 = vpop.f32.mrf.mxu0
  %v1163 = vadd.f32 %v1100, %v1162
  %v1164 = vand.u32 %v951, 4294901760
  %v1165 = vsub.f32 %v951, %v1164
  %1166 = vmatmul.f32.gmra.mxu0 %v1165
  %v1167 = vpop.f32.mrf.mxu0
  %v1168 = vadd.f32 %v1104, %v1167
  %v1169 = vand.u32 %v954, 4294901760
  %v1170 = vsub.f32 %v954, %v1169
  %1171 = vmatmul.f32.gmra.mxu0 %v1170
  %v1172 = vpop.f32.mrf.mxu0
  %v1173 = vadd.f32 %v1108, %v1172
  %1174 = vdwg.mxu0
  %1175 = vmatpush.msra.mxu0 0.0
  %1176 = vmatpush.msra.mxu0 0.0
  %1177 = vmatpush.msra.mxu0 0.0
  %1178 = vmatpush.msra.mxu0 0.0
  %1179 = vmatpush.msra.mxu0 0.0
  %1180 = vmatpush.msra.mxu0 0.0
  %1181 = vmatpush.msra.mxu0 0.0
  %1182 = vmatpush.msra.mxu0 0.0
  %1183 = vmatpush.msra.mxu0 0.0
  %1184 = vmatpush.msra.mxu0 0.0
  %1185 = vmatpush.msra.mxu0 0.0
  %1186 = vmatpush.msra.mxu0 0.0
  %v1187 = vand.u32 %v927, 4294901760
  %1188 = vmatpush.msra.mxu0 %v1187
  %v1189 = vand.u32 %v926, 4294901760
  %1190 = vmatpush.msra.mxu0 %v1189
  %v1191 = vand.u32 %v925, 4294901760
  %1192 = vmatpush.msra.mxu0 %v1191
  %v1193 = vand.u32 %v924, 4294901760
  %1194 = vmatpush.msra.mxu0 %v1193
  %v1195 = vand.u32 %v933, 4294901760
  %v1196 = vsub.f32 %v933, %v1195
  %v1197 = vand.u32 %v1196, 4294901760
  %1198 = vmatmul.f32.gmra.mxu0 %v1197
  %v1199 = vpop.f32.mrf.mxu0
  %v1200 = vadd.f32 %v1138, %v1199
  %v1201 = vand.u32 %v936, 4294901760
  %v1202 = vsub.f32 %v936, %v1201
  %v1203 = vand.u32 %v1202, 4294901760
  %1204 = vmatmul.f32.gmra.mxu0 %v1203
  %v1205 = vpop.f32.mrf.mxu0
  %v1206 = vadd.f32 %v1143, %v1205
  %v1207 = vand.u32 %v939, 4294901760
  %v1208 = vsub.f32 %v939, %v1207
  %v1209 = vand.u32 %v1208, 4294901760
  %1210 = vmatmul.f32.gmra.mxu0 %v1209
  %v1211 = vpop.f32.mrf.mxu0
  %v1212 = vadd.f32 %v1148, %v1211
  %v1213 = vand.u32 %v942, 4294901760
  %v1214 = vsub.f32 %v942, %v1213
  %v1215 = vand.u32 %v1214, 4294901760
  %1216 = vmatmul.f32.gmra.mxu0 %v1215
  %v1217 = vpop.f32.mrf.mxu0
  %v1218 = vadd.f32 %v1153, %v1217
  %v1219 = vand.u32 %v945, 4294901760
  %v1220 = vsub.f32 %v945, %v1219
  %v1221 = vand.u32 %v1220, 4294901760
  %1222 = vmatmul.f32.gmra.mxu0 %v1221
  %v1223 = vpop.f32.mrf.mxu0
  %v1224 = vadd.f32 %v1158, %v1223
  %v1225 = vand.u32 %v948, 4294901760
  %v1226 = vsub.f32 %v948, %v1225
  %v1227 = vand.u32 %v1226, 4294901760
  %1228 = vmatmul.f32.gmra.mxu0 %v1227
  %v1229 = vpop.f32.mrf.mxu0
  %v1230 = vadd.f32 %v1163, %v1229
  %v1231 = vand.u32 %v951, 4294901760
  %v1232 = vsub.f32 %v951, %v1231
  %v1233 = vand.u32 %v1232, 4294901760
  %1234 = vmatmul.f32.gmra.mxu0 %v1233
  %v1235 = vpop.f32.mrf.mxu0
  %v1236 = vadd.f32 %v1168, %v1235
  %v1237 = vand.u32 %v954, 4294901760
  %v1238 = vsub.f32 %v954, %v1237
  %v1239 = vand.u32 %v1238, 4294901760
  %1240 = vmatmul.f32.gmra.mxu0 %v1239
  %v1241 = vpop.f32.mrf.mxu0
  %v1242 = vadd.f32 %v1173, %v1241
  %1243 = vdwg.mxu0
  %1244 = vmatpush.msra.mxu0 0.0
  %1245 = vmatpush.msra.mxu0 0.0
  %1246 = vmatpush.msra.mxu0 0.0
  %1247 = vmatpush.msra.mxu0 0.0
  %1248 = vmatpush.msra.mxu0 0.0
  %1249 = vmatpush.msra.mxu0 0.0
  %1250 = vmatpush.msra.mxu0 0.0
  %1251 = vmatpush.msra.mxu0 0.0
  %1252 = vmatpush.msra.mxu0 0.0
  %1253 = vmatpush.msra.mxu0 0.0
  %1254 = vmatpush.msra.mxu0 0.0
  %1255 = vmatpush.msra.mxu0 0.0
  %v1256 = vand.u32 %v927, 4294901760
  %v1257 = vsub.f32 %v927, %v1256
  %v1258 = vand.u32 %v1257, 4294901760
  %1259 = vmatpush.msra.mxu0 %v1258
  %v1260 = vand.u32 %v926, 4294901760
  %v1261 = vsub.f32 %v926, %v1260
  %v1262 = vand.u32 %v1261, 4294901760
  %1263 = vmatpush.msra.mxu0 %v1262
  %v1264 = vand.u32 %v925, 4294901760
  %v1265 = vsub.f32 %v925, %v1264
  %v1266 = vand.u32 %v1265, 4294901760
  %1267 = vmatpush.msra.mxu0 %v1266
  %v1268 = vand.u32 %v924, 4294901760
  %v1269 = vsub.f32 %v924, %v1268
  %v1270 = vand.u32 %v1269, 4294901760
  %1271 = vmatpush.msra.mxu0 %v1270
  %v1272 = vand.u32 %v933, 4294901760
  %1273 = vmatmul.f32.gmra.mxu0 %v1272
  %v1274 = vpop.f32.mrf.mxu0
  %v1275 = vadd.f32 %v1200, %v1274
  %v1276 = vand.u32 %v936, 4294901760
  %1277 = vmatmul.f32.gmra.mxu0 %v1276
  %v1278 = vpop.f32.mrf.mxu0
  %v1279 = vadd.f32 %v1206, %v1278
  %v1280 = vand.u32 %v939, 4294901760
  %1281 = vmatmul.f32.gmra.mxu0 %v1280
  %v1282 = vpop.f32.mrf.mxu0
  %v1283 = vadd.f32 %v1212, %v1282
  %v1284 = vand.u32 %v942, 4294901760
  %1285 = vmatmul.f32.gmra.mxu0 %v1284
  %v1286 = vpop.f32.mrf.mxu0
  %v1287 = vadd.f32 %v1218, %v1286
  %v1288 = vand.u32 %v945, 4294901760
  %1289 = vmatmul.f32.gmra.mxu0 %v1288
  %v1290 = vpop.f32.mrf.mxu0
  %v1291 = vadd.f32 %v1224, %v1290
  %v1292 = vand.u32 %v948, 4294901760
  %1293 = vmatmul.f32.gmra.mxu0 %v1292
  %v1294 = vpop.f32.mrf.mxu0
  %v1295 = vadd.f32 %v1230, %v1294
  %v1296 = vand.u32 %v951, 4294901760
  %1297 = vmatmul.f32.gmra.mxu0 %v1296
  %v1298 = vpop.f32.mrf.mxu0
  %v1299 = vadd.f32 %v1236, %v1298
  %v1300 = vand.u32 %v954, 4294901760
  %1301 = vmatmul.f32.gmra.mxu0 %v1300
  %v1302 = vpop.f32.mrf.mxu0
  %v1303 = vadd.f32 %v1242, %v1302
  %1304 = vdwg.mxu0
  %1305 = vmatpush.msra.mxu0 0.0
  %1306 = vmatpush.msra.mxu0 0.0
  %1307 = vmatpush.msra.mxu0 0.0
  %1308 = vmatpush.msra.mxu0 0.0
  %1309 = vmatpush.msra.mxu0 0.0
  %1310 = vmatpush.msra.mxu0 0.0
  %1311 = vmatpush.msra.mxu0 0.0
  %1312 = vmatpush.msra.mxu0 0.0
  %1313 = vmatpush.msra.mxu0 0.0
  %1314 = vmatpush.msra.mxu0 0.0
  %1315 = vmatpush.msra.mxu0 0.0
  %1316 = vmatpush.msra.mxu0 0.0
  %v1317 = vand.u32 %v927, 4294901760
  %1318 = vmatpush.msra.mxu0 %v1317
  %v1319 = vand.u32 %v926, 4294901760
  %1320 = vmatpush.msra.mxu0 %v1319
  %v1321 = vand.u32 %v925, 4294901760
  %1322 = vmatpush.msra.mxu0 %v1321
  %v1323 = vand.u32 %v924, 4294901760
  %1324 = vmatpush.msra.mxu0 %v1323
  %v1325 = vand.u32 %v933, 4294901760
  %1326 = vmatmul.f32.gmra.mxu0 %v1325
  %v1327 = vpop.f32.mrf.mxu0
  %v1328 = vadd.f32 %v1275, %v1327
  %v1329 = vand.u32 %v936, 4294901760
  %1330 = vmatmul.f32.gmra.mxu0 %v1329
  %v1331 = vpop.f32.mrf.mxu0
  %v1332 = vadd.f32 %v1279, %v1331
  %v1333 = vand.u32 %v939, 4294901760
  %1334 = vmatmul.f32.gmra.mxu0 %v1333
  %v1335 = vpop.f32.mrf.mxu0
  %v1336 = vadd.f32 %v1283, %v1335
  %v1337 = vand.u32 %v942, 4294901760
  %1338 = vmatmul.f32.gmra.mxu0 %v1337
  %v1339 = vpop.f32.mrf.mxu0
  %v1340 = vadd.f32 %v1287, %v1339
  %v1341 = vand.u32 %v945, 4294901760
  %1342 = vmatmul.f32.gmra.mxu0 %v1341
  %v1343 = vpop.f32.mrf.mxu0
  %v1344 = vadd.f32 %v1291, %v1343
  %v1345 = vand.u32 %v948, 4294901760
  %1346 = vmatmul.f32.gmra.mxu0 %v1345
  %v1347 = vpop.f32.mrf.mxu0
  %v1348 = vadd.f32 %v1295, %v1347
  %v1349 = vand.u32 %v951, 4294901760
  %1350 = vmatmul.f32.gmra.mxu0 %v1349
  %v1351 = vpop.f32.mrf.mxu0
  %v1352 = vadd.f32 %v1299, %v1351
  %v1353 = vand.u32 %v954, 4294901760
  %1354 = vmatmul.f32.gmra.mxu0 %v1353
  %v1355 = vpop.f32.mrf.mxu0
  %v1356 = vadd.f32 %v1303, %v1355
  %1357 = vdwg.mxu0
  %v1358 = vtanh.pop %v1328
  %v1359 = vtanh.pop %v1332
  %v1360 = vtanh.pop %v1336
  %v1361 = vtanh.pop %v1340
  %v1362 = vtanh.pop %v1344
  %v1363 = vtanh.pop %v1348
  %v1364 = vtanh.pop %v1352
  %v1365 = vtanh.pop %v1356
  %vm1366 = vcmask 64512
  %1367 = vst.msk [vmem:[%s7] sm:$0xff] %vm1366, %v1358
  %1368 = vst.msk [vmem:[%s7 + $0x8] sm:$0xff] %vm1366, %v1359
  %1369 = vst.msk [vmem:[%s7 + $0x10] sm:$0xff] %vm1366, %v1360
  %1370 = vst.msk [vmem:[%s7 + $0x18] sm:$0xff] %vm1366, %v1361
  %1371 = vst.msk [vmem:[%s7 + $0x20] sm:$0xff] %vm1366, %v1362
  %1372 = vst.msk [vmem:[%s7 + $0x28] sm:$0xff] %vm1366, %v1363
  %1373 = vst.msk [vmem:[%s7 + $0x30] sm:$0xff] %vm1366, %v1364
  %1374 = vst.msk [vmem:[%s7 + $0x38] sm:$0xff] %vm1366, %v1365
  // Predicated region
  $region30: #{tpu_custom_call.1} parent=0 // pred_check
    _
  $region31: #{tpu_custom_call.1} parent=0 // pred_check_branch
    %1376 = sbr.rel (0) target = $region33
  $region32: #{tpu_custom_call.1} parent=0 // pred_region
    _
  $region33: #{tpu_custom_call.1} parent=0 // pred_fallthru
    _
  // Predicated region
  $region34: #{tpu_custom_call.1} parent=0 // pred_check
    _
  $region35: #{tpu_custom_call.1} parent=0 // pred_check_branch
    %1378 = sbr.rel (0) target = $region37
  $region36: #{tpu_custom_call.1} parent=0 // pred_region
    _
  $region37: #{tpu_custom_call.1} parent=0 // pred_fallthru
    _

</llo_original>
